<compile_context>
chip_gen: v7x
topology: tpu7x:2x2x1
jax: 0.10.0
libtpu: 0.0.40
codegen_flags: <defaults>
</compile_context>

<pallas_src>
import jax
import jax.numpy as jnp
from jax.experimental import pallas as pl
from jax.experimental.pallas import tpu as pltpu

NEG_SLOPE = 0.01    # torch.nn.LeakyReLU default negative_slope


def _round_up(n, m):
    return ((n + m - 1) // m) * m


def _leaky_relu(x):
    return jnp.where(x > 0, x, NEG_SLOPE * x)


def decoder_kernel(x_ref, w0_ref, b0_ref, w1_ref, b1_ref, w2_ref, b2_ref,
                   cc_ref, o_ref):
    x = x_ref[...].astype(jnp.float32)

    # Hoist bias loads (loaded once per grid step).
    b0 = b0_ref[...]
    b1 = b1_ref[...]
    b2 = b2_ref[...]

    # --- ResidualLinear(dim0): x = x + (x @ W0 + b0), then LeakyReLU ---
    h = x + (jnp.dot(x, w0_ref[...], preferred_element_type=jnp.float32) + b0)
    h = _leaky_relu(h)

    # --- Linear(dim0 -> dim1) + LeakyReLU ---
    h = jnp.dot(h, w1_ref[...], preferred_element_type=jnp.float32) + b1
    h = _leaky_relu(h)

    # --- Linear(dim1 -> dim2)  (last MLP layer: no activation) ---
    h = jnp.dot(h, w2_ref[...], preferred_element_type=jnp.float32) + b2

    # --- Softmax over last dim, normalization folded into the output ---
    m = jnp.max(h, axis=-1, keepdims=True)
    e = jnp.exp(h - m)
    s = jnp.sum(e, axis=-1, keepdims=True)

    # --- matmul with (lane-padded) cluster centers, then scale by 1/sum ---
    o = jnp.dot(e, cc_ref[...], preferred_element_type=jnp.float32)
    o_ref[...] = (o * pl.reciprocal(s, approx=False)).astype(o_ref.dtype)


def decoder_forward(x, params, *, tm=None):
    """x: (N, dim0) float32.  params: (w0, b0, w1, b1, w2, b2, cc).

    Returns (N, cc.shape[1]) float32.
    """
    w0, b0, w1, b1, w2, b2, cc = params
    N, D0 = x.shape
    K = cc.shape[1]

    if tm is None:
        # Large tile (amortize ~0.35us/step pipeline overhead), capped at 2048
        # (~2.5 MB double-buffered blocks, well under scoped VMEM on all
        # generations), and sized so the grid has >= 2 parallel steps whenever
        # possible (v7x: 2 TensorCores share the "parallel" grid axis).
        tm = min(2048, max(8, _round_up(pl.cdiv(N, 2), 8)))

    # No full-array pad of x to a multiple of tm: partial last block is fine
    # (row-local garbage, OOB output rows are discarded).  Only pad in the
    # degenerate single-tile case so block_shape never exceeds the array.
    if N < tm:
        x = jnp.pad(x, ((0, tm - N), (0, 0)))
    Nk = x.shape[0]
    grid_n = pl.cdiv(Nk, tm)

    # Narrow output: pad K only up to a multiple of 8 lanes (write-bound
    # kernel -> minimize HBM store bytes).  Block last dim == array last dim,
    # so any Kp is a legal block shape.
    Kp = _round_up(K, 8) if K <= 128 else _round_up(K, 128)
    cc_p = jnp.pad(cc, ((0, 0), (0, Kp - K))) if Kp != K else cc

    def full_spec(arr):
        nd = arr.ndim
        return pl.BlockSpec(arr.shape, lambda i, _nd=nd: (0,) * _nd)

    out = pl.pallas_call(
        decoder_kernel,
        out_shape=jax.ShapeDtypeStruct((Nk, Kp), jnp.float32),
        grid_spec=pltpu.PrefetchScalarGridSpec(
            num_scalar_prefetch=0,
            grid=(grid_n,),
            in_specs=[
                pl.BlockSpec((tm, D0), lambda i: (i, 0)),   # x tile
                full_spec(w0), full_spec(b0),
                full_spec(w1), full_spec(b1),
                full_spec(w2), full_spec(b2),
                full_spec(cc_p),
            ],
            out_specs=pl.BlockSpec((tm, Kp), lambda i: (i, 0)),
        ),
        compiler_params=pltpu.CompilerParams(
            dimension_semantics=("parallel",)),
    )(x, w0, b0, w1, b1, w2, b2, cc_p)

    # Only the lane slice (and row slice in the single-tile pad case) remains;
    # TODO(synk): fuse this slice into the consumer for a zero-copy hand-off.
    if Nk != N or Kp != K:
        out = out[:N, :K]
    return out


def ref_forward(x, params):
    """Pure-JAX reference mirroring the PyTorch module."""
    w0, b0, w1, b1, w2, b2, cc = params
    h = x + (x @ w0 + b0)                     # ResidualLinear
    h = jnp.where(h > 0, h, NEG_SLOPE * h)    # LeakyReLU
    h = h @ w1 + b1
    h = jnp.where(h > 0, h, NEG_SLOPE * h)
    h = h @ w2 + b2
    p = jax.nn.softmax(h, axis=-1)
    return p @ cc


def make_params(key, dim_list, n_out):
    """Deterministic synthetic parameters (shapes match the torch module)."""
    d0, d1, d2, d3 = dim_list
    ks = jax.random.split(key, 7)
    scale = 0.1
    w0 = scale * jax.random.normal(ks[0], (d0, d1), jnp.float32)
    b0 = scale * jax.random.normal(ks[1], (1, d1), jnp.float32)
    w1 = scale * jax.random.normal(ks[2], (d1, d2), jnp.float32)
    b1 = scale * jax.random.normal(ks[3], (1, d2), jnp.float32)
    w2 = scale * jax.random.normal(ks[4], (d2, d3), jnp.float32)
    b2 = scale * jax.random.normal(ks[5], (1, d3), jnp.float32)
    cc = jax.random.normal(ks[6], (d3, n_out), jnp.float32)  # cluster_centers
    return (w0, b0, w1, b1, w2, b2, cc)


if __name__ == "__main__":
    dim_list = [32, 32, 64, 16]   # residual layer, then 32->64, 64->16
    n_out = 3                     # cluster_centers: (16, 3)

    key = jax.random.PRNGKey(0)
    kx, kx2, kp = jax.random.split(key, 3)
    params = make_params(kp, dim_list, n_out)

    # Even batch (2 grid steps of tm=32).
    N = 64
    x = jax.random.normal(kx, (N, dim_list[0]), jnp.float32)
    out = jax.block_until_ready(decoder_forward(x, params))
    ref = ref_forward(x, params)
    assert out.shape == (N, n_out), out.shape
    assert jnp.allclose(out, ref, atol=1e-5, rtol=1e-4), (
        f"max abs err {jnp.max(jnp.abs(out - ref))}")

    # Uneven batch (exercises the partial last block: no full-array pad).
    N2 = 53
    x2 = jax.random.normal(kx2, (N2, dim_list[0]), jnp.float32)
    out2 = jax.block_until_ready(decoder_forward(x2, params))
    ref2 = ref_forward(x2, params)
    assert out2.shape == (N2, n_out), out2.shape
    assert jnp.allclose(out2, ref2, atol=1e-5, rtol=1e-4), (
        f"max abs err {jnp.max(jnp.abs(out2 - ref2))}")

    print("KERNEL_OK")
</pallas_src>

<mosaic_0001>
module attributes {stable_mosaic.version = 11 : i64} {
  func.func @decoder_kernel(%arg0: i32, %arg1: memref<32x32xf32, #tpu.memory_space<vmem>>, %arg2: memref<32x32xf32, #tpu.memory_space<vmem>>, %arg3: memref<1x32xf32, #tpu.memory_space<vmem>>, %arg4: memref<32x64xf32, #tpu.memory_space<vmem>>, %arg5: memref<1x64xf32, #tpu.memory_space<vmem>>, %arg6: memref<64x16xf32, #tpu.memory_space<vmem>>, %arg7: memref<1x16xf32, #tpu.memory_space<vmem>>, %arg8: memref<16x8xf32, #tpu.memory_space<vmem>>, %arg9: memref<32x8xf32, #tpu.memory_space<vmem>>) attributes {dimension_semantics = [#tpu.dimension_semantics<parallel>], iteration_bounds = array<i64: 2>, scalar_prefetch = 0 : i64, scratch_operands = 0 : i64, tpu.core_type = #tpu.core_type<tc>, window_params = [{transform_indices = @transform_0, window_bounds = array<i64: 32, 32>}, {pipeline_mode = #tpu.pipeline_mode<synchronous>, transform_indices = @transform_1, window_bounds = array<i64: 32, 32>}, {pipeline_mode = #tpu.pipeline_mode<synchronous>, transform_indices = @transform_2, window_bounds = array<i64: 1, 32>}, {pipeline_mode = #tpu.pipeline_mode<synchronous>, transform_indices = @transform_3, window_bounds = array<i64: 32, 64>}, {pipeline_mode = #tpu.pipeline_mode<synchronous>, transform_indices = @transform_4, window_bounds = array<i64: 1, 64>}, {pipeline_mode = #tpu.pipeline_mode<synchronous>, transform_indices = @transform_5, window_bounds = array<i64: 64, 16>}, {pipeline_mode = #tpu.pipeline_mode<synchronous>, transform_indices = @transform_6, window_bounds = array<i64: 1, 16>}, {pipeline_mode = #tpu.pipeline_mode<synchronous>, transform_indices = @transform_7, window_bounds = array<i64: 16, 8>}, {transform_indices = @transform_8, window_bounds = array<i64: 32, 8>}]} {
    %c0 = arith.constant 0 : index
    %c0_0 = arith.constant 0 : index
    %0 = vector.load %arg1[%c0, %c0_0] : memref<32x32xf32, #tpu.memory_space<vmem>>, vector<32x32xf32>
    %c0_1 = arith.constant 0 : index
    %c0_2 = arith.constant 0 : index
    %1 = vector.load %arg3[%c0_1, %c0_2] : memref<1x32xf32, #tpu.memory_space<vmem>>, vector<1x32xf32>
    %c0_3 = arith.constant 0 : index
    %c0_4 = arith.constant 0 : index
    %2 = vector.load %arg5[%c0_3, %c0_4] : memref<1x64xf32, #tpu.memory_space<vmem>>, vector<1x64xf32>
    %c0_5 = arith.constant 0 : index
    %c0_6 = arith.constant 0 : index
    %3 = vector.load %arg7[%c0_5, %c0_6] : memref<1x16xf32, #tpu.memory_space<vmem>>, vector<1x16xf32>
    %c0_7 = arith.constant 0 : index
    %c0_8 = arith.constant 0 : index
    %4 = vector.load %arg2[%c0_7, %c0_8] : memref<32x32xf32, #tpu.memory_space<vmem>>, vector<32x32xf32>
    %cst = arith.constant dense<0.000000e+00> : vector<32x32xf32>
    %5 = tpu.matmul %0, %4, %cst {dimension_numbers = #tpu.dot_dimension_numbers<[1], [0], [0], [1], [0, 0, 1, 1], [], []>} : vector<32x32xf32>, vector<32x32xf32>, vector<32x32xf32> -> vector<32x32xf32>
    %6 = vector.broadcast %1 : vector<1x32xf32> to vector<32x32xf32>
    %7 = arith.addf %5, %6 : vector<32x32xf32>
    %8 = arith.addf %0, %7 : vector<32x32xf32>
    %cst_9 = arith.constant 0.000000e+00 : f32
    %9 = vector.broadcast %cst_9 : f32 to vector<32x32xf32>
    %10 = arith.cmpf ogt, %8, %9 : vector<32x32xf32>
    %cst_10 = arith.constant 0.00999999977 : f32
    %11 = vector.broadcast %cst_10 : f32 to vector<32x32xf32>
    %12 = arith.mulf %11, %8 : vector<32x32xf32>
    %13 = arith.select %10, %8, %12 : vector<32x32xi1>, vector<32x32xf32>
    %c0_11 = arith.constant 0 : index
    %c0_12 = arith.constant 0 : index
    %14 = vector.load %arg4[%c0_11, %c0_12] : memref<32x64xf32, #tpu.memory_space<vmem>>, vector<32x64xf32>
    %cst_13 = arith.constant dense<0.000000e+00> : vector<32x64xf32>
    %15 = tpu.matmul %13, %14, %cst_13 {dimension_numbers = #tpu.dot_dimension_numbers<[1], [0], [0], [1], [0, 0, 1, 1], [], []>} : vector<32x32xf32>, vector<32x64xf32>, vector<32x64xf32> -> vector<32x64xf32>
    %16 = vector.broadcast %2 : vector<1x64xf32> to vector<32x64xf32>
    %17 = arith.addf %15, %16 : vector<32x64xf32>
    %cst_14 = arith.constant 0.000000e+00 : f32
    %18 = vector.broadcast %cst_14 : f32 to vector<32x64xf32>
    %19 = arith.cmpf ogt, %17, %18 : vector<32x64xf32>
    %cst_15 = arith.constant 0.00999999977 : f32
    %20 = vector.broadcast %cst_15 : f32 to vector<32x64xf32>
    %21 = arith.mulf %20, %17 : vector<32x64xf32>
    %22 = arith.select %19, %17, %21 : vector<32x64xi1>, vector<32x64xf32>
    %c0_16 = arith.constant 0 : index
    %c0_17 = arith.constant 0 : index
    %23 = vector.load %arg6[%c0_16, %c0_17] : memref<64x16xf32, #tpu.memory_space<vmem>>, vector<64x16xf32>
    %cst_18 = arith.constant dense<0.000000e+00> : vector<32x16xf32>
    %24 = tpu.matmul %22, %23, %cst_18 {dimension_numbers = #tpu.dot_dimension_numbers<[1], [0], [0], [1], [0, 0, 1, 1], [], []>} : vector<32x64xf32>, vector<64x16xf32>, vector<32x16xf32> -> vector<32x16xf32>
    %25 = vector.broadcast %3 : vector<1x16xf32> to vector<32x16xf32>
    %26 = arith.addf %24, %25 : vector<32x16xf32>
    %cst_19 = arith.constant dense<0xFF800000> : vector<32xf32>
    %27 = vector.multi_reduction <maximumf>, %26, %cst_19 [1] : vector<32x16xf32> to vector<32xf32>
    %28 = vector.shape_cast %27 : vector<32xf32> to vector<32x1xf32>
    %29 = vector.broadcast %28 : vector<32x1xf32> to vector<32x16xf32>
    %30 = arith.subf %26, %29 : vector<32x16xf32>
    %31 = math.exp %30 : vector<32x16xf32>
    %cst_20 = arith.constant dense<0.000000e+00> : vector<32xf32>
    %32 = vector.multi_reduction <add>, %31, %cst_20 [1] : vector<32x16xf32> to vector<32xf32>
    %33 = vector.shape_cast %32 : vector<32xf32> to vector<32x1xf32>
    %c0_21 = arith.constant 0 : index
    %c0_22 = arith.constant 0 : index
    %34 = vector.load %arg8[%c0_21, %c0_22] : memref<16x8xf32, #tpu.memory_space<vmem>>, vector<16x8xf32>
    %cst_23 = arith.constant dense<0.000000e+00> : vector<32x8xf32>
    %35 = tpu.matmul %31, %34, %cst_23 {dimension_numbers = #tpu.dot_dimension_numbers<[1], [0], [0], [1], [0, 0, 1, 1], [], []>} : vector<32x16xf32>, vector<16x8xf32>, vector<32x8xf32> -> vector<32x8xf32>
    %36 = tpu.reciprocal %33 : vector<32x1xf32> -> vector<32x1xf32>
    %37 = vector.broadcast %36 : vector<32x1xf32> to vector<32x8xf32>
    %38 = arith.mulf %35, %37 : vector<32x8xf32>
    %c0_24 = arith.constant 0 : index
    %c0_25 = arith.constant 0 : index
    %39 = vector.load %arg9[%c0_24, %c0_25] : memref<32x8xf32, #tpu.memory_space<vmem>>, vector<32x8xf32>
    tpu.vector_store %arg9[%c0_24, %c0_25], %38 {strides = array<i32>} : memref<32x8xf32, #tpu.memory_space<vmem>>, vector<32x8xf32>,
    return
  }
  func.func @transform_0(%arg0: i32) -> (i32, i32) {
    %c0_i32 = arith.constant 0 : i32
    %c0_i32_0 = arith.constant 0 : i32
    return %arg0, %c0_i32 : i32, i32
  }
  func.func @transform_1(%arg0: i32) -> (i32, i32) {
    %c0_i32 = arith.constant 0 : i32
    %c0_i32_0 = arith.constant 0 : i32
    %c0_i32_1 = arith.constant 0 : i32
    return %c0_i32, %c0_i32_0 : i32, i32
  }
  func.func @transform_2(%arg0: i32) -> (i32, i32) {
    %c0_i32 = arith.constant 0 : i32
    %c0_i32_0 = arith.constant 0 : i32
    %c0_i32_1 = arith.constant 0 : i32
    return %c0_i32, %c0_i32_0 : i32, i32
  }
  func.func @transform_3(%arg0: i32) -> (i32, i32) {
    %c0_i32 = arith.constant 0 : i32
    %c0_i32_0 = arith.constant 0 : i32
    %c0_i32_1 = arith.constant 0 : i32
    return %c0_i32, %c0_i32_0 : i32, i32
  }
  func.func @transform_4(%arg0: i32) -> (i32, i32) {
    %c0_i32 = arith.constant 0 : i32
    %c0_i32_0 = arith.constant 0 : i32
    %c0_i32_1 = arith.constant 0 : i32
    return %c0_i32, %c0_i32_0 : i32, i32
  }
  func.func @transform_5(%arg0: i32) -> (i32, i32) {
    %c0_i32 = arith.constant 0 : i32
    %c0_i32_0 = arith.constant 0 : i32
    %c0_i32_1 = arith.constant 0 : i32
    return %c0_i32, %c0_i32_0 : i32, i32
  }
  func.func @transform_6(%arg0: i32) -> (i32, i32) {
    %c0_i32 = arith.constant 0 : i32
    %c0_i32_0 = arith.constant 0 : i32
    %c0_i32_1 = arith.constant 0 : i32
    return %c0_i32, %c0_i32_0 : i32, i32
  }
  func.func @transform_7(%arg0: i32) -> (i32, i32) {
    %c0_i32 = arith.constant 0 : i32
    %c0_i32_0 = arith.constant 0 : i32
    %c0_i32_1 = arith.constant 0 : i32
    return %c0_i32, %c0_i32_0 : i32, i32
  }
  func.func @transform_8(%arg0: i32) -> (i32, i32) {
    %c0_i32 = arith.constant 0 : i32
    %c0_i32_0 = arith.constant 0 : i32
    return %arg0, %c0_i32 : i32, i32
  }
}

</mosaic_0001>

<llo_original>
// kernel: tpu_custom_call.1
$region0: #{tpu_custom_call.1}
  #allocation0 [shape = 'u32[]', space=smem, size = 0x4, offset = 0x4, fixed_abs, tag = 'smem constant byte address 0x4 - core index']
  #allocation1 [shape = 'u32[144,128]{1,0:T(1,128)}', space=vmem, size = 0x12000, scoped, tag = 'internal scratch']
  %s0 = inlined_call_operand.vmem [shape: f32[64,32], index: 0, kind: input, shape index: {}]
  %s1 = inlined_call_operand.vmem [shape: f32[32,32], index: 1, kind: input, shape index: {}]
  %s2 = inlined_call_operand.vmem [shape: f32[1,32], index: 2, kind: input, shape index: {}]
  %s3 = inlined_call_operand.vmem [shape: f32[32,64], index: 3, kind: input, shape index: {}]
  %s4 = inlined_call_operand.vmem [shape: f32[1,64], index: 4, kind: input, shape index: {}]
  %s5 = inlined_call_operand.vmem [shape: f32[64,16], index: 5, kind: input, shape index: {}]
  %s6 = inlined_call_operand.vmem [shape: f32[1,16], index: 6, kind: input, shape index: {}]
  %s7 = inlined_call_operand.vmem [shape: f32[16,8], index: 7, kind: input, shape index: {}]
  %s8 = inlined_call_operand.vmem [shape: f32[64,8], index: 8, kind: output, shape index: {}]
  %s9 = sld [smem:[#allocation0]]
  $region65: #{tpu_custom_call.1} parent=0
    _
  %s11 = ssub.s32 1, %s9
  %s12 = scalar_select 0, %s11, %s9
  loop: start=0, step=1, limit=4
  $region2: #{tpu_custom_call.1} parent=0 // loop_pre_header
    _
  $region3: #{tpu_custom_call.1} parent=0 // loop_header
    %s14 = sphi 0, %s18
    %p15 = scmp.ge.s32.totalorder %s14, 4
    %s24 = sphi 0, %s26
    %s27 = sphi 0, %s24
    %s28 = sphi 0, %s27
    %s44 = sphi 0, %s28
    %s48 = sphi 0, %s48
    %s50 = sphi 0, %s48
    %s51 = sphi 0, %s50
    %s65 = sphi 0, %s51
    %s69 = sphi 0, %s69
    %s71 = sphi 0, %s69
    %s72 = sphi 0, %s71
    %s86 = sphi 0, %s72
    %s90 = sphi 0, %s90
    %s92 = sphi 0, %s90
    %s93 = sphi 0, %s92
    %s107 = sphi 0, %s93
    %s111 = sphi 0, %s111
    %s113 = sphi 0, %s111
    %s114 = sphi 0, %s113
    %s128 = sphi 0, %s114
    %s132 = sphi 0, %s132
    %s134 = sphi 0, %s132
    %s135 = sphi 0, %s134
    %s149 = sphi 0, %s135
    %s153 = sphi 0, %s153
    %s155 = sphi 0, %s153
    %s156 = sphi 0, %s155
    %s170 = sphi 0, %s156
    %s174 = sphi 0, %s174
    %s176 = sphi 0, %s174
    %s177 = sphi 0, %s176
    %s191 = sphi 0, %s177
    %s197 = sphi 0, %s199
    %s200 = sphi 0, %s197
    %s201 = sphi 0, %s200
    %s217 = sphi 0, %s201
  $region4: #{tpu_custom_call.1} parent=0 // loop_header_branch
    %17 = sbr.rel (%p15) target = $region8
  $region5: #{tpu_custom_call.1} parent=0 // loop_body
    %s19 = ssub.s32 %s14, 1
    %s20 = ssub.s32 %s14, 2
    %s21 = sadd.s32 %s14, 1
    %s22 = ssub.s32 %s14, %s21
    %p23 = scmp.eq.s32.totalorder %s22, 0
    %s25 = sadd.s32 %s24, 1
    %s26 = scalar_select %p23, %s24, %s25
    %p29 = pneg %p23
    %p30 = scmp.eq.s32.totalorder %s14, 1
    %p31 = por %p29, %p30
    %p32 = scmp.ne.s32.totalorder %s24, %s27
    %p33 = scmp.eq.s32.totalorder %s14, 0
    %p34 = por %p32, %p33
    %p35 = scmp.ne.s32.totalorder %s24, %s27
    %p36 = scmp.eq.s32.totalorder %s19, 1
    %p37 = por %p35, %p36
    %p38 = scmp.ne.s32.totalorder %s27, %s28
    %p39 = scmp.eq.s32.totalorder %s19, 0
    %p40 = por %p38, %p39
    %p41 = scmp.ne.s32.totalorder %s27, %s28
    %p42 = scmp.eq.s32.totalorder %s20, 1
    %p43 = por %p41, %p42
    %p45 = scmp.ne.s32.totalorder %s28, %s44
    %p46 = scmp.eq.s32.totalorder %s20, 0
    %p47 = por %p45, %p46
    %s49 = sadd.s32 %s48, 1
    %p52 = scmp.eq.s32.totalorder %s14, 1
    %p53 = scmp.ne.s32.totalorder %s48, %s50
    %p54 = scmp.eq.s32.totalorder %s14, 0
    %p55 = por %p53, %p54
    %p56 = scmp.ne.s32.totalorder %s48, %s50
    %p57 = scmp.eq.s32.totalorder %s19, 1
    %p58 = por %p56, %p57
    %p59 = scmp.ne.s32.totalorder %s50, %s51
    %p60 = scmp.eq.s32.totalorder %s19, 0
    %p61 = por %p59, %p60
    %p62 = scmp.ne.s32.totalorder %s50, %s51
    %p63 = scmp.eq.s32.totalorder %s20, 1
    %p64 = por %p62, %p63
    %p66 = scmp.ne.s32.totalorder %s51, %s65
    %p67 = scmp.eq.s32.totalorder %s20, 0
    %p68 = por %p66, %p67
    %s70 = sadd.s32 %s69, 1
    %p73 = scmp.eq.s32.totalorder %s14, 1
    %p74 = scmp.ne.s32.totalorder %s69, %s71
    %p75 = scmp.eq.s32.totalorder %s14, 0
    %p76 = por %p74, %p75
    %p77 = scmp.ne.s32.totalorder %s69, %s71
    %p78 = scmp.eq.s32.totalorder %s19, 1
    %p79 = por %p77, %p78
    %p80 = scmp.ne.s32.totalorder %s71, %s72
    %p81 = scmp.eq.s32.totalorder %s19, 0
    %p82 = por %p80, %p81
    %p83 = scmp.ne.s32.totalorder %s71, %s72
    %p84 = scmp.eq.s32.totalorder %s20, 1
    %p85 = por %p83, %p84
    %p87 = scmp.ne.s32.totalorder %s72, %s86
    %p88 = scmp.eq.s32.totalorder %s20, 0
    %p89 = por %p87, %p88
    %s91 = sadd.s32 %s90, 1
    %p94 = scmp.eq.s32.totalorder %s14, 1
    %p95 = scmp.ne.s32.totalorder %s90, %s92
    %p96 = scmp.eq.s32.totalorder %s14, 0
    %p97 = por %p95, %p96
    %p98 = scmp.ne.s32.totalorder %s90, %s92
    %p99 = scmp.eq.s32.totalorder %s19, 1
    %p100 = por %p98, %p99
    %p101 = scmp.ne.s32.totalorder %s92, %s93
    %p102 = scmp.eq.s32.totalorder %s19, 0
    %p103 = por %p101, %p102
    %p104 = scmp.ne.s32.totalorder %s92, %s93
    %p105 = scmp.eq.s32.totalorder %s20, 1
    %p106 = por %p104, %p105
    %p108 = scmp.ne.s32.totalorder %s93, %s107
    %p109 = scmp.eq.s32.totalorder %s20, 0
    %p110 = por %p108, %p109
    %s112 = sadd.s32 %s111, 1
    %p115 = scmp.eq.s32.totalorder %s14, 1
    %p116 = scmp.ne.s32.totalorder %s111, %s113
    %p117 = scmp.eq.s32.totalorder %s14, 0
    %p118 = por %p116, %p117
    %p119 = scmp.ne.s32.totalorder %s111, %s113
    %p120 = scmp.eq.s32.totalorder %s19, 1
    %p121 = por %p119, %p120
    %p122 = scmp.ne.s32.totalorder %s113, %s114
    %p123 = scmp.eq.s32.totalorder %s19, 0
    %p124 = por %p122, %p123
    %p125 = scmp.ne.s32.totalorder %s113, %s114
    %p126 = scmp.eq.s32.totalorder %s20, 1
    %p127 = por %p125, %p126
    %p129 = scmp.ne.s32.totalorder %s114, %s128
    %p130 = scmp.eq.s32.totalorder %s20, 0
    %p131 = por %p129, %p130
    %s133 = sadd.s32 %s132, 1
    %p136 = scmp.eq.s32.totalorder %s14, 1
    %p137 = scmp.ne.s32.totalorder %s132, %s134
    %p138 = scmp.eq.s32.totalorder %s14, 0
    %p139 = por %p137, %p138
    %p140 = scmp.ne.s32.totalorder %s132, %s134
    %p141 = scmp.eq.s32.totalorder %s19, 1
    %p142 = por %p140, %p141
    %p143 = scmp.ne.s32.totalorder %s134, %s135
    %p144 = scmp.eq.s32.totalorder %s19, 0
    %p145 = por %p143, %p144
    %p146 = scmp.ne.s32.totalorder %s134, %s135
    %p147 = scmp.eq.s32.totalorder %s20, 1
    %p148 = por %p146, %p147
    %p150 = scmp.ne.s32.totalorder %s135, %s149
    %p151 = scmp.eq.s32.totalorder %s20, 0
    %p152 = por %p150, %p151
    %s154 = sadd.s32 %s153, 1
    %p157 = scmp.eq.s32.totalorder %s14, 1
    %p158 = scmp.ne.s32.totalorder %s153, %s155
    %p159 = scmp.eq.s32.totalorder %s14, 0
    %p160 = por %p158, %p159
    %p161 = scmp.ne.s32.totalorder %s153, %s155
    %p162 = scmp.eq.s32.totalorder %s19, 1
    %p163 = por %p161, %p162
    %p164 = scmp.ne.s32.totalorder %s155, %s156
    %p165 = scmp.eq.s32.totalorder %s19, 0
    %p166 = por %p164, %p165
    %p167 = scmp.ne.s32.totalorder %s155, %s156
    %p168 = scmp.eq.s32.totalorder %s20, 1
    %p169 = por %p167, %p168
    %p171 = scmp.ne.s32.totalorder %s156, %s170
    %p172 = scmp.eq.s32.totalorder %s20, 0
    %p173 = por %p171, %p172
    %s175 = sadd.s32 %s174, 1
    %p178 = scmp.eq.s32.totalorder %s14, 1
    %p179 = scmp.ne.s32.totalorder %s174, %s176
    %p180 = scmp.eq.s32.totalorder %s14, 0
    %p181 = por %p179, %p180
    %p182 = scmp.ne.s32.totalorder %s174, %s176
    %p183 = scmp.eq.s32.totalorder %s19, 1
    %p184 = por %p182, %p183
    %p185 = scmp.ne.s32.totalorder %s176, %s177
    %p186 = scmp.eq.s32.totalorder %s19, 0
    %p187 = por %p185, %p186
    %p188 = scmp.ne.s32.totalorder %s176, %s177
    %p189 = scmp.eq.s32.totalorder %s20, 1
    %p190 = por %p188, %p189
    %p192 = scmp.ne.s32.totalorder %s177, %s191
    %p193 = scmp.eq.s32.totalorder %s20, 0
    %p194 = por %p192, %p193
    %s195 = ssub.s32 %s14, %s21
    %p196 = scmp.eq.s32.totalorder %s195, 0
    %s198 = sadd.s32 %s197, 1
    %s199 = scalar_select %p196, %s197, %s198
    %p202 = pneg %p196
    %p203 = scmp.eq.s32.totalorder %s14, 1
    %p204 = por %p202, %p203
    %p205 = scmp.ne.s32.totalorder %s197, %s200
    %p206 = scmp.eq.s32.totalorder %s14, 0
    %p207 = por %p205, %p206
    %p208 = scmp.ne.s32.totalorder %s197, %s200
    %p209 = scmp.eq.s32.totalorder %s19, 1
    %p210 = por %p208, %p209
    %p211 = scmp.ne.s32.totalorder %s200, %s201
    %p212 = scmp.eq.s32.totalorder %s19, 0
    %p213 = por %p211, %p212
    %p214 = scmp.ne.s32.totalorder %s200, %s201
    %p215 = scmp.eq.s32.totalorder %s20, 1
    %p216 = por %p214, %p215
    %p218 = scmp.ne.s32.totalorder %s201, %s217
    %p219 = scmp.eq.s32.totalorder %s20, 0
    %p220 = por %p218, %p219
    %p221 = scmp.le.s32.totalorder 1, %s14
    %p222 = scmp.lt.s32.totalorder %s14, 3
    %p223 = pnand %p221, %p222
    %p224 = pneg %p223
    // Predicated region
    $region9: #{tpu_custom_call.1} parent=5 // pred_check
      _
    $region10: #{tpu_custom_call.1} parent=5 // pred_check_branch
      %226 = sbr.rel (%p223) target = $region12
    $region11: #{tpu_custom_call.1} parent=5 // pred_region
      %s227 = ssub.s32 %s14, 1
      // Predicated region
      $region13: #{tpu_custom_call.1} parent=11 // pred_check
        %p228 = pneg %p61
      $region14: #{tpu_custom_call.1} parent=11 // pred_check_branch
        %230 = sbr.rel (%p228) target = $region16
      $region15: #{tpu_custom_call.1} parent=11 // pred_region
        _
      $region16: #{tpu_custom_call.1} parent=11 // pred_fallthru
        _
      // Predicated region
      $region17: #{tpu_custom_call.1} parent=11 // pred_check
        %p231 = pneg %p82
      $region18: #{tpu_custom_call.1} parent=11 // pred_check_branch
        %233 = sbr.rel (%p231) target = $region20
      $region19: #{tpu_custom_call.1} parent=11 // pred_region
        _
      $region20: #{tpu_custom_call.1} parent=11 // pred_fallthru
        _
      // Predicated region
      $region21: #{tpu_custom_call.1} parent=11 // pred_check
        %p234 = pneg %p103
      $region22: #{tpu_custom_call.1} parent=11 // pred_check_branch
        %236 = sbr.rel (%p234) target = $region24
      $region23: #{tpu_custom_call.1} parent=11 // pred_region
        _
      $region24: #{tpu_custom_call.1} parent=11 // pred_fallthru
        _
      // Predicated region
      $region25: #{tpu_custom_call.1} parent=11 // pred_check
        %p237 = pneg %p124
      $region26: #{tpu_custom_call.1} parent=11 // pred_check_branch
        %239 = sbr.rel (%p237) target = $region28
      $region27: #{tpu_custom_call.1} parent=11 // pred_region
        _
      $region28: #{tpu_custom_call.1} parent=11 // pred_fallthru
        _
      // Predicated region
      $region29: #{tpu_custom_call.1} parent=11 // pred_check
        %p240 = pneg %p145
      $region30: #{tpu_custom_call.1} parent=11 // pred_check_branch
        %242 = sbr.rel (%p240) target = $region32
      $region31: #{tpu_custom_call.1} parent=11 // pred_region
        _
      $region32: #{tpu_custom_call.1} parent=11 // pred_fallthru
        _
      // Predicated region
      $region33: #{tpu_custom_call.1} parent=11 // pred_check
        %p243 = pneg %p166
      $region34: #{tpu_custom_call.1} parent=11 // pred_check_branch
        %245 = sbr.rel (%p243) target = $region36
      $region35: #{tpu_custom_call.1} parent=11 // pred_region
        _
      $region36: #{tpu_custom_call.1} parent=11 // pred_fallthru
        _
      // Predicated region
      $region37: #{tpu_custom_call.1} parent=11 // pred_check
        %p246 = pneg %p187
      $region38: #{tpu_custom_call.1} parent=11 // pred_check_branch
        %248 = sbr.rel (%p246) target = $region40
      $region39: #{tpu_custom_call.1} parent=11 // pred_region
        _
      $region40: #{tpu_custom_call.1} parent=11 // pred_fallthru
        _
    $region12: #{tpu_custom_call.1} parent=5 // pred_fallthru
      _
    %p249 = scmp.lt.s32.totalorder %s14, 2
    // Predicated region
    $region41: #{tpu_custom_call.1} parent=5 // pred_check
      %p250 = pneg %p249
    $region42: #{tpu_custom_call.1} parent=5 // pred_check_branch
      %252 = sbr.rel (%p250) target = $region44
    $region43: #{tpu_custom_call.1} parent=5 // pred_region
      // Predicated region
      $region45: #{tpu_custom_call.1} parent=43 // pred_check
        %p253 = pneg %p34
      $region46: #{tpu_custom_call.1} parent=43 // pred_check_branch
        %255 = sbr.rel (%p253) target = $region48
      $region47: #{tpu_custom_call.1} parent=43 // pred_region
        %s256 = smul.u32 4, %s14
        %p257 = scmp.lt.s32.totalorder %s256, 7
        %s258 = scalar_select %p257, %s256, 7
        %s259 = smul.addr %s258, 8
        %s260 = scalar_lea.vmem %s0, %s259
        %s261 = smul.u32 4, %s14
      $region48: #{tpu_custom_call.1} parent=43 // pred_fallthru
        _
    $region44: #{tpu_custom_call.1} parent=5 // pred_fallthru
      _
    %p262 = scmp.le.s32.totalorder 1, %s14
    %p263 = scmp.lt.s32.totalorder %s14, 3
    %p264 = pnand %p262, %p263
    %p265 = pneg %p264
    // Predicated region
    $region49: #{tpu_custom_call.1} parent=5 // pred_check
      _
    $region50: #{tpu_custom_call.1} parent=5 // pred_check_branch
      %267 = sbr.rel (%p264) target = $region52
    $region51: #{tpu_custom_call.1} parent=5 // pred_region
      %s268 = ssub.s32 %s14, 1
      %s269 = smul.u32 4, %s19
      %p270 = scmp.lt.s32.totalorder %s269, 7
      %s271 = scalar_select %p270, %s269, 7
      %s272 = smul.addr %s271, 8
      %s273 = scalar_lea.vmem %s0, %s272
      %p274 = pneg %p40
      %p275 = pneg %p37
      %p276 = pneg %p61
      %p277 = pneg %p58
      %p278 = pneg %p82
      %p279 = pneg %p79
      %p280 = pneg %p103
      %p281 = pneg %p100
      %p282 = pneg %p124
      %p283 = pneg %p121
      %p284 = pneg %p145
      %p285 = pneg %p142
      %p286 = pneg %p166
      %p287 = pneg %p163
      %p288 = pneg %p187
      %p289 = pneg %p184
      %p290 = pneg %p213
      %p291 = pneg %p210
      %s292 = smul.u32 4, %s19
      %p293 = scmp.lt.s32.totalorder %s292, 7
      %s294 = scalar_select %p293, %s292, 7
      %s295 = smul.addr %s294, 8
      %s296 = scalar_lea.vmem %s8, %s295
      %s297 = smul.u32 4, %s19
      %p298 = scmp.lt.s32.totalorder %s297, 7
      %s299 = scalar_select %p298, %s297, 7
      %s300 = smul.addr %s299, 8
      %s301 = scalar_lea.vmem %s0, %s300
      %s302 = smul.u32 4, %s19
      %s303 = smul.u32 4, %s19
      %p304 = scmp.lt.s32.totalorder %s303, 7
      %s305 = scalar_select %p304, %s303, 7
      %s306 = smul.addr %s305, 8
      %s307 = scalar_lea.vmem %s8, %s306
      %s308 = smul.u32 4, %s19
      %v309 = vld [vmem:[%s301] sm:$0xff]
      %v310 = vld [vmem:[%s301 + $0x8] sm:$0xff]
      %v311 = vld [vmem:[%s301 + $0x10] sm:$0xff]
      %v312 = vld [vmem:[%s301 + $0x18] sm:$0xff]
      %v313 = vld [vmem:[%s2] sm:$0x1]
      %v314 = vld [vmem:[%s4] sm:$0x1]
      %v315 = vld [vmem:[%s6] sm:$0x1]
      %v316 = vld [vmem:[%s1] sm:$0xff]
      %v317 = vld [vmem:[%s1 + $0x8] sm:$0xff]
      %v318 = vld [vmem:[%s1 + $0x10] sm:$0xff]
      %v319 = vld [vmem:[%s1 + $0x18] sm:$0xff]
      %v321 = vlaneseq
      %v322 = vshrl.u32 %v321, 7
      %v323 = vsub.s32 0, %v322
      %v324 = vrot.slane %v313, %v323
      %vm326 = vcmask 261120
      %v328 = vsel %vm326, %v309, 0
      %v331 = vsel %vm326, %v310, 0
      %v334 = vsel %vm326, %v311, 0
      %v337 = vsel %vm326, %v312, 0
      %339 = vmatprep.subr.mxu0 0.0
      %340 = vmatpush1.msra.mxu0 %v316
      %341 = vmatprep.subr.mxu0 0.0
      %342 = vmatpush1.msra.mxu0 %v317
      %343 = vmatprep.subr.mxu0 0.0
      %344 = vmatpush1.msra.mxu0 %v318
      %345 = vmatprep.subr.mxu0 0.0
      %346 = vmatpush1.msra.mxu0 %v319
      %347 = vmatprep.subr.mxu0 0.0
      %348 = vmatpush1.msra.mxu0 0.0
      %349 = vmatprep.subr.mxu0 0.0
      %350 = vmatpush1.msra.mxu0 0.0
      %351 = vmatprep.subr.mxu0 0.0
      %352 = vmatpush1.msra.mxu0 0.0
      %353 = vmatprep.subr.mxu0 0.0
      %354 = vmatpush1.msra.mxu0 0.0
      %355 = vmatprep.subr.mxu0 0.0
      %356 = vmatpush1.msra.mxu0 0.0
      %357 = vmatprep.subr.mxu0 0.0
      %358 = vmatpush1.msra.mxu0 0.0
      %359 = vmatprep.subr.mxu0 0.0
      %360 = vmatpush1.msra.mxu0 0.0
      %361 = vmatprep.subr.mxu0 0.0
      %362 = vmatpush1.msra.mxu0 0.0
      %363 = vmatprep.subr.mxu0 0.0
      %364 = vmatpush1.msra.mxu0 0.0
      %365 = vmatprep.subr.mxu0 0.0
      %366 = vmatpush1.msra.mxu0 0.0
      %367 = vmatprep.subr.mxu0 0.0
      %368 = vmatpush1.msra.mxu0 0.0
      %369 = vmatprep.subr.mxu0 0.0
      %370 = vmatpush1.msra.mxu0 0.0
      %371 = vmatprep.subr.mxu0 0.0
      %372 = vmatpush1.msra.mxu0 0.0
      %373 = vmatprep.subr.mxu0 0.0
      %374 = vmatpush1.msra.mxu0 0.0
      %375 = vmatprep.subr.mxu0 0.0
      %376 = vmatpush1.msra.mxu0 0.0
      %377 = vmatprep.subr.mxu0 0.0
      %378 = vmatpush1.msra.mxu0 0.0
      %379 = vmatprep.subr.mxu0 0.0
      %380 = vmatpush1.msra.mxu0 0.0
      %381 = vmatprep.subr.mxu0 0.0
      %382 = vmatpush1.msra.mxu0 0.0
      %383 = vmatprep.subr.mxu0 0.0
      %384 = vmatpush1.msra.mxu0 0.0
      %385 = vmatprep.subr.mxu0 0.0
      %386 = vmatpush1.msra.mxu0 0.0
      %387 = vmatprep.subr.mxu0 0.0
      %388 = vmatpush1.msra.mxu0 0.0
      %389 = vmatprep.subr.mxu0 0.0
      %390 = vmatpush1.msra.mxu0 0.0
      %391 = vmatprep.subr.mxu0 0.0
      %392 = vmatpush1.msra.mxu0 0.0
      %393 = vmatprep.subr.mxu0 0.0
      %394 = vmatpush1.msra.mxu0 0.0
      %395 = vmatprep.subr.mxu0 0.0
      %396 = vmatpush1.msra.mxu0 0.0
      %397 = vmatprep.subr.mxu0 0.0
      %398 = vmatpush1.msra.mxu0 0.0
      %399 = vmatprep.subr.mxu0 0.0
      %400 = vmatpush1.msra.mxu0 0.0
      %401 = vmatprep.subr.mxu0 0.0
      %402 = vmatpush1.msra.mxu0 0.0
      %403 = vmatprep.mubr.f32.mxu0 0.0
      %404 = vmatmul.mubr.f32.gmra.mrb[0].mxu0 %v328
      %v405 = vpop.f32.mrb[0].mxu0
      %v406 = vadd.f32 %v324, %v405
      %v407 = vpop.f32.mrb[0].mxu0
      %408 = vmatprep.mubr.f32.mxu0 0.0
      %409 = vmatmul.mubr.f32.gmra.mrb[0].mxu0 %v331
      %v410 = vpop.f32.mrb[0].mxu0
      %v411 = vadd.f32 %v324, %v410
      %v412 = vpop.f32.mrb[0].mxu0
      %413 = vmatprep.mubr.f32.mxu0 0.0
      %414 = vmatmul.mubr.f32.gmra.mrb[0].mxu0 %v334
      %v415 = vpop.f32.mrb[0].mxu0
      %v416 = vadd.f32 %v324, %v415
      %v417 = vpop.f32.mrb[0].mxu0
      %418 = vmatprep.mubr.f32.mxu0 0.0
      %419 = vmatmul.mubr.f32.gmra.mrb[0].mxu0 %v337
      %v420 = vpop.f32.mrb[0].mxu0
      %v421 = vadd.f32 %v324, %v420
      %v422 = vpop.f32.mrb[0].mxu0
      %423 = vdwg.mxu0
      %v424 = vadd.f32 %v309, %v406
      %v425 = vadd.f32 %v310, %v411
      %v426 = vadd.f32 %v311, %v416
      %v427 = vadd.f32 %v312, %v421
      %vm428 = vcmp.gt.f32.partialorder %v424, 0.0
      %vm429 = vcmp.gt.f32.partialorder %v425, 0.0
      %vm430 = vcmp.gt.f32.partialorder %v426, 0.0
      %vm431 = vcmp.gt.f32.partialorder %v427, 0.0
      %v432 = vmul.f32 %v424, 0.01
      %v433 = vmul.f32 %v425, 0.01
      %v434 = vmul.f32 %v426, 0.01
      %v435 = vmul.f32 %v427, 0.01
      %v436 = vsel %vm428, %v424, %v432
      %v437 = vsel %vm429, %v425, %v433
      %v438 = vsel %vm430, %v426, %v434
      %v439 = vsel %vm431, %v427, %v435
      %v440 = vld [vmem:[%s3] sm:$0xff]
      %v441 = vld [vmem:[%s3 + $0x8] sm:$0xff]
      %v442 = vld [vmem:[%s3 + $0x10] sm:$0xff]
      %v443 = vld [vmem:[%s3 + $0x18] sm:$0xff]
      %v445 = vlaneseq
      %v446 = vshrl.u32 %v445, 7
      %v447 = vsub.s32 0, %v446
      %v448 = vrot.slane %v314, %v447
      %v451 = vsel %vm326, %v436, 0
      %v454 = vsel %vm326, %v437, 0
      %v457 = vsel %vm326, %v438, 0
      %v460 = vsel %vm326, %v439, 0
      %462 = vmatprep.subr.mxu0 0.0
      %463 = vmatpush1.msra.mxu0 %v440
      %464 = vmatprep.subr.mxu0 0.0
      %465 = vmatpush1.msra.mxu0 %v441
      %466 = vmatprep.subr.mxu0 0.0
      %467 = vmatpush1.msra.mxu0 %v442
      %468 = vmatprep.subr.mxu0 0.0
      %469 = vmatpush1.msra.mxu0 %v443
      %470 = vmatprep.subr.mxu0 0.0
      %471 = vmatpush1.msra.mxu0 0.0
      %472 = vmatprep.subr.mxu0 0.0
      %473 = vmatpush1.msra.mxu0 0.0
      %474 = vmatprep.subr.mxu0 0.0
      %475 = vmatpush1.msra.mxu0 0.0
      %476 = vmatprep.subr.mxu0 0.0
      %477 = vmatpush1.msra.mxu0 0.0
      %478 = vmatprep.subr.mxu0 0.0
      %479 = vmatpush1.msra.mxu0 0.0
      %480 = vmatprep.subr.mxu0 0.0
      %481 = vmatpush1.msra.mxu0 0.0
      %482 = vmatprep.subr.mxu0 0.0
      %483 = vmatpush1.msra.mxu0 0.0
      %484 = vmatprep.subr.mxu0 0.0
      %485 = vmatpush1.msra.mxu0 0.0
      %486 = vmatprep.subr.mxu0 0.0
      %487 = vmatpush1.msra.mxu0 0.0
      %488 = vmatprep.subr.mxu0 0.0
      %489 = vmatpush1.msra.mxu0 0.0
      %490 = vmatprep.subr.mxu0 0.0
      %491 = vmatpush1.msra.mxu0 0.0
      %492 = vmatprep.subr.mxu0 0.0
      %493 = vmatpush1.msra.mxu0 0.0
      %494 = vmatprep.subr.mxu0 0.0
      %495 = vmatpush1.msra.mxu0 0.0
      %496 = vmatprep.subr.mxu0 0.0
      %497 = vmatpush1.msra.mxu0 0.0
      %498 = vmatprep.subr.mxu0 0.0
      %499 = vmatpush1.msra.mxu0 0.0
      %500 = vmatprep.subr.mxu0 0.0
      %501 = vmatpush1.msra.mxu0 0.0
      %502 = vmatprep.subr.mxu0 0.0
      %503 = vmatpush1.msra.mxu0 0.0
      %504 = vmatprep.subr.mxu0 0.0
      %505 = vmatpush1.msra.mxu0 0.0
      %506 = vmatprep.subr.mxu0 0.0
      %507 = vmatpush1.msra.mxu0 0.0
      %508 = vmatprep.subr.mxu0 0.0
      %509 = vmatpush1.msra.mxu0 0.0
      %510 = vmatprep.subr.mxu0 0.0
      %511 = vmatpush1.msra.mxu0 0.0
      %512 = vmatprep.subr.mxu0 0.0
      %513 = vmatpush1.msra.mxu0 0.0
      %514 = vmatprep.subr.mxu0 0.0
      %515 = vmatpush1.msra.mxu0 0.0
      %516 = vmatprep.subr.mxu0 0.0
      %517 = vmatpush1.msra.mxu0 0.0
      %518 = vmatprep.subr.mxu0 0.0
      %519 = vmatpush1.msra.mxu0 0.0
      %520 = vmatprep.subr.mxu0 0.0
      %521 = vmatpush1.msra.mxu0 0.0
      %522 = vmatprep.subr.mxu0 0.0
      %523 = vmatpush1.msra.mxu0 0.0
      %524 = vmatprep.subr.mxu0 0.0
      %525 = vmatpush1.msra.mxu0 0.0
      %526 = vmatprep.mubr.f32.mxu0 0.0
      %527 = vmatmul.mubr.f32.gmra.mrb[0].mxu0 %v451
      %v528 = vpop.f32.mrb[0].mxu0
      %v529 = vadd.f32 %v448, %v528
      %v530 = vpop.f32.mrb[0].mxu0
      %531 = vmatprep.mubr.f32.mxu0 0.0
      %532 = vmatmul.mubr.f32.gmra.mrb[0].mxu0 %v454
      %v533 = vpop.f32.mrb[0].mxu0
      %v534 = vadd.f32 %v448, %v533
      %v535 = vpop.f32.mrb[0].mxu0
      %536 = vmatprep.mubr.f32.mxu0 0.0
      %537 = vmatmul.mubr.f32.gmra.mrb[0].mxu0 %v457
      %v538 = vpop.f32.mrb[0].mxu0
      %v539 = vadd.f32 %v448, %v538
      %v540 = vpop.f32.mrb[0].mxu0
      %541 = vmatprep.mubr.f32.mxu0 0.0
      %542 = vmatmul.mubr.f32.gmra.mrb[0].mxu0 %v460
      %v543 = vpop.f32.mrb[0].mxu0
      %v544 = vadd.f32 %v448, %v543
      %v545 = vpop.f32.mrb[0].mxu0
      %546 = vdwg.mxu0
      %vm547 = vcmp.gt.f32.partialorder %v529, 0.0
      %vm548 = vcmp.gt.f32.partialorder %v534, 0.0
      %vm549 = vcmp.gt.f32.partialorder %v539, 0.0
      %vm550 = vcmp.gt.f32.partialorder %v544, 0.0
      %v551 = vmul.f32 %v529, 0.01
      %v552 = vmul.f32 %v534, 0.01
      %v553 = vmul.f32 %v539, 0.01
      %v554 = vmul.f32 %v544, 0.01
      %v555 = vsel %vm547, %v529, %v551
      %v556 = vsel %vm548, %v534, %v552
      %v557 = vsel %vm549, %v539, %v553
      %v558 = vsel %vm550, %v544, %v554
      %v559 = vld [vmem:[%s5] sm:$0xff]
      %v560 = vld [vmem:[%s5 + $0x8] sm:$0xff]
      %v561 = vld [vmem:[%s5 + $0x10] sm:$0xff]
      %v562 = vld [vmem:[%s5 + $0x18] sm:$0xff]
      %v563 = vld [vmem:[%s5 + $0x20] sm:$0xff]
      %v564 = vld [vmem:[%s5 + $0x28] sm:$0xff]
      %v565 = vld [vmem:[%s5 + $0x30] sm:$0xff]
      %v566 = vld [vmem:[%s5 + $0x38] sm:$0xff]
      %v568 = vlaneseq
      %v569 = vshrl.u32 %v568, 7
      %v570 = vsub.s32 0, %v569
      %v571 = vrot.slane %v315, %v570
      %vm573 = vcmask 523264
      %v575 = vsel %vm573, %v555, 0
      %v578 = vsel %vm573, %v556, 0
      %v581 = vsel %vm573, %v557, 0
      %v584 = vsel %vm573, %v558, 0
      %586 = vmatprep.subr.mxu0 0.0
      %587 = vmatpush1.msra.mxu0 %v559
      %588 = vmatprep.subr.mxu0 0.0
      %589 = vmatpush1.msra.mxu0 %v560
      %590 = vmatprep.subr.mxu0 0.0
      %591 = vmatpush1.msra.mxu0 %v561
      %592 = vmatprep.subr.mxu0 0.0
      %593 = vmatpush1.msra.mxu0 %v562
      %594 = vmatprep.subr.mxu0 0.0
      %595 = vmatpush1.msra.mxu0 %v563
      %596 = vmatprep.subr.mxu0 0.0
      %597 = vmatpush1.msra.mxu0 %v564
      %598 = vmatprep.subr.mxu0 0.0
      %599 = vmatpush1.msra.mxu0 %v565
      %600 = vmatprep.subr.mxu0 0.0
      %601 = vmatpush1.msra.mxu0 %v566
      %602 = vmatprep.subr.mxu0 0.0
      %603 = vmatpush1.msra.mxu0 0.0
      %604 = vmatprep.subr.mxu0 0.0
      %605 = vmatpush1.msra.mxu0 0.0
      %606 = vmatprep.subr.mxu0 0.0
      %607 = vmatpush1.msra.mxu0 0.0
      %608 = vmatprep.subr.mxu0 0.0
      %609 = vmatpush1.msra.mxu0 0.0
      %610 = vmatprep.subr.mxu0 0.0
      %611 = vmatpush1.msra.mxu0 0.0
      %612 = vmatprep.subr.mxu0 0.0
      %613 = vmatpush1.msra.mxu0 0.0
      %614 = vmatprep.subr.mxu0 0.0
      %615 = vmatpush1.msra.mxu0 0.0
      %616 = vmatprep.subr.mxu0 0.0
      %617 = vmatpush1.msra.mxu0 0.0
      %618 = vmatprep.subr.mxu0 0.0
      %619 = vmatpush1.msra.mxu0 0.0
      %620 = vmatprep.subr.mxu0 0.0
      %621 = vmatpush1.msra.mxu0 0.0
      %622 = vmatprep.subr.mxu0 0.0
      %623 = vmatpush1.msra.mxu0 0.0
      %624 = vmatprep.subr.mxu0 0.0
      %625 = vmatpush1.msra.mxu0 0.0
      %626 = vmatprep.subr.mxu0 0.0
      %627 = vmatpush1.msra.mxu0 0.0
      %628 = vmatprep.subr.mxu0 0.0
      %629 = vmatpush1.msra.mxu0 0.0
      %630 = vmatprep.subr.mxu0 0.0
      %631 = vmatpush1.msra.mxu0 0.0
      %632 = vmatprep.subr.mxu0 0.0
      %633 = vmatpush1.msra.mxu0 0.0
      %634 = vmatprep.subr.mxu0 0.0
      %635 = vmatpush1.msra.mxu0 0.0
      %636 = vmatprep.subr.mxu0 0.0
      %637 = vmatpush1.msra.mxu0 0.0
      %638 = vmatprep.subr.mxu0 0.0
      %639 = vmatpush1.msra.mxu0 0.0
      %640 = vmatprep.subr.mxu0 0.0
      %641 = vmatpush1.msra.mxu0 0.0
      %642 = vmatprep.subr.mxu0 0.0
      %643 = vmatpush1.msra.mxu0 0.0
      %644 = vmatprep.subr.mxu0 0.0
      %645 = vmatpush1.msra.mxu0 0.0
      %646 = vmatprep.subr.mxu0 0.0
      %647 = vmatpush1.msra.mxu0 0.0
      %648 = vmatprep.subr.mxu0 0.0
      %649 = vmatpush1.msra.mxu0 0.0
      %650 = vmatprep.mubr.f32.mxu0 0.0
      %651 = vmatmul.mubr.f32.gmra.mrb[0].mxu0 %v575
      %v652 = vpop.f32.mrb[0].mxu0
      %v653 = vadd.f32 %v571, %v652
      %v654 = vpop.f32.mrb[0].mxu0
      %655 = vmatprep.mubr.f32.mxu0 0.0
      %656 = vmatmul.mubr.f32.gmra.mrb[0].mxu0 %v578
      %v657 = vpop.f32.mrb[0].mxu0
      %v658 = vadd.f32 %v571, %v657
      %v659 = vpop.f32.mrb[0].mxu0
      %660 = vmatprep.mubr.f32.mxu0 0.0
      %661 = vmatmul.mubr.f32.gmra.mrb[0].mxu0 %v581
      %v662 = vpop.f32.mrb[0].mxu0
      %v663 = vadd.f32 %v571, %v662
      %v664 = vpop.f32.mrb[0].mxu0
      %665 = vmatprep.mubr.f32.mxu0 0.0
      %666 = vmatmul.mubr.f32.gmra.mrb[0].mxu0 %v584
      %v667 = vpop.f32.mrb[0].mxu0
      %v668 = vadd.f32 %v571, %v667
      %v669 = vpop.f32.mrb[0].mxu0
      %670 = vdwg.mxu0
      %vm671 = vcmask 130048
      %v672 = vsel %vm671, %v653, -inf
      %673 = vmax.xlane.f32.xlu0 %v672
      %v674 = vpop.xlane.xlu0 %673
      %v675 = vsel %vm671, %v658, -inf
      %676 = vmax.xlane.f32.xlu0 %v675
      %v677 = vpop.xlane.xlu0 %676
      %v678 = vsel %vm671, %v663, -inf
      %679 = vmax.xlane.f32.xlu0 %v678
      %v680 = vpop.xlane.xlu0 %679
      %v681 = vsel %vm671, %v668, -inf
      %682 = vmax.xlane.f32.xlu0 %v681
      %v683 = vpop.xlane.xlu0 %682
      %v684 = vsub.f32 %v653, %v674
      %v685 = vsub.f32 %v658, %v677
      %v686 = vsub.f32 %v663, %v680
      %v687 = vsub.f32 %v668, %v683
      %v688 = vmul.f32 %v684, 1.442695
      %v689 = vpow.pop %v688
      %v690 = vmul.f32 %v685, 1.442695
      %v691 = vpow.pop %v690
      %v692 = vmul.f32 %v686, 1.442695
      %v693 = vpow.pop %v692
      %v694 = vmul.f32 %v687, 1.442695
      %v695 = vpow.pop %v694
      %v696 = vsel %vm671, %v689, 0.0
      %697 = vadd.xlane.f32.xlu0 %v696
      %v698 = vpop.xlane.xlu0 %697
      %v699 = vsel %vm671, %v691, 0.0
      %700 = vadd.xlane.f32.xlu0 %v699
      %v701 = vpop.xlane.xlu0 %700
      %v702 = vsel %vm671, %v693, 0.0
      %703 = vadd.xlane.f32.xlu0 %v702
      %v704 = vpop.xlane.xlu0 %703
      %v705 = vsel %vm671, %v695, 0.0
      %706 = vadd.xlane.f32.xlu0 %v705
      %v707 = vpop.xlane.xlu0 %706
      %v708 = vld [vmem:[%s7] sm:$0xff]
      %v709 = vld [vmem:[%s7 + $0x8] sm:$0xff]
      %v711 = vsel %vm671, %v689, 0
      %v714 = vsel %vm671, %v691, 0
      %v717 = vsel %vm671, %v693, 0
      %v720 = vsel %vm671, %v695, 0
      %722 = vmatprep.subr.mxu0 0.0
      %723 = vmatpush1.msra.mxu0 %v708
      %724 = vmatprep.subr.mxu0 0.0
      %725 = vmatpush1.msra.mxu0 %v709
      %726 = vmatprep.subr.mxu0 0.0
      %727 = vmatpush1.msra.mxu0 0.0
      %728 = vmatprep.subr.mxu0 0.0
      %729 = vmatpush1.msra.mxu0 0.0
      %730 = vmatprep.subr.mxu0 0.0
      %731 = vmatpush1.msra.mxu0 0.0
      %732 = vmatprep.subr.mxu0 0.0
      %733 = vmatpush1.msra.mxu0 0.0
      %734 = vmatprep.subr.mxu0 0.0
      %735 = vmatpush1.msra.mxu0 0.0
      %736 = vmatprep.subr.mxu0 0.0
      %737 = vmatpush1.msra.mxu0 0.0
      %738 = vmatprep.subr.mxu0 0.0
      %739 = vmatpush1.msra.mxu0 0.0
      %740 = vmatprep.subr.mxu0 0.0
      %741 = vmatpush1.msra.mxu0 0.0
      %742 = vmatprep.subr.mxu0 0.0
      %743 = vmatpush1.msra.mxu0 0.0
      %744 = vmatprep.subr.mxu0 0.0
      %745 = vmatpush1.msra.mxu0 0.0
      %746 = vmatprep.subr.mxu0 0.0
      %747 = vmatpush1.msra.mxu0 0.0
      %748 = vmatprep.subr.mxu0 0.0
      %749 = vmatpush1.msra.mxu0 0.0
      %750 = vmatprep.subr.mxu0 0.0
      %751 = vmatpush1.msra.mxu0 0.0
      %752 = vmatprep.subr.mxu0 0.0
      %753 = vmatpush1.msra.mxu0 0.0
      %754 = vmatprep.subr.mxu0 0.0
      %755 = vmatpush1.msra.mxu0 0.0
      %756 = vmatprep.subr.mxu0 0.0
      %757 = vmatpush1.msra.mxu0 0.0
      %758 = vmatprep.subr.mxu0 0.0
      %759 = vmatpush1.msra.mxu0 0.0
      %760 = vmatprep.subr.mxu0 0.0
      %761 = vmatpush1.msra.mxu0 0.0
      %762 = vmatprep.subr.mxu0 0.0
      %763 = vmatpush1.msra.mxu0 0.0
      %764 = vmatprep.subr.mxu0 0.0
      %765 = vmatpush1.msra.mxu0 0.0
      %766 = vmatprep.subr.mxu0 0.0
      %767 = vmatpush1.msra.mxu0 0.0
      %768 = vmatprep.subr.mxu0 0.0
      %769 = vmatpush1.msra.mxu0 0.0
      %770 = vmatprep.subr.mxu0 0.0
      %771 = vmatpush1.msra.mxu0 0.0
      %772 = vmatprep.subr.mxu0 0.0
      %773 = vmatpush1.msra.mxu0 0.0
      %774 = vmatprep.subr.mxu0 0.0
      %775 = vmatpush1.msra.mxu0 0.0
      %776 = vmatprep.subr.mxu0 0.0
      %777 = vmatpush1.msra.mxu0 0.0
      %778 = vmatprep.subr.mxu0 0.0
      %779 = vmatpush1.msra.mxu0 0.0
      %780 = vmatprep.subr.mxu0 0.0
      %781 = vmatpush1.msra.mxu0 0.0
      %782 = vmatprep.subr.mxu0 0.0
      %783 = vmatpush1.msra.mxu0 0.0
      %784 = vmatprep.subr.mxu0 0.0
      %785 = vmatpush1.msra.mxu0 0.0
      %786 = vmatprep.mubr.f32.mxu0 0.0
      %787 = vmatmul.mubr.f32.gmra.mrb[0].mxu0 %v711
      %v788 = vpop.f32.mrb[0].mxu0
      %v789 = vadd.f32 0.0, %v788
      %v790 = vpop.f32.mrb[0].mxu0
      %791 = vmatprep.mubr.f32.mxu0 0.0
      %792 = vmatmul.mubr.f32.gmra.mrb[0].mxu0 %v714
      %v793 = vpop.f32.mrb[0].mxu0
      %v794 = vadd.f32 0.0, %v793
      %v795 = vpop.f32.mrb[0].mxu0
      %796 = vmatprep.mubr.f32.mxu0 0.0
      %797 = vmatmul.mubr.f32.gmra.mrb[0].mxu0 %v717
      %v798 = vpop.f32.mrb[0].mxu0
      %v799 = vadd.f32 0.0, %v798
      %v800 = vpop.f32.mrb[0].mxu0
      %801 = vmatprep.mubr.f32.mxu0 0.0
      %802 = vmatmul.mubr.f32.gmra.mrb[0].mxu0 %v720
      %v803 = vpop.f32.mrb[0].mxu0
      %v804 = vadd.f32 0.0, %v803
      %v805 = vpop.f32.mrb[0].mxu0
      %806 = vdwg.mxu0
      %v807 = vrcp.pop %v698
      %v808 = vrcp.pop %v701
      %v809 = vrcp.pop %v704
      %v810 = vrcp.pop %v707
      %v811 = vmul.f32 %v789, %v807
      %v812 = vmul.f32 %v794, %v808
      %v813 = vmul.f32 %v799, %v809
      %v814 = vmul.f32 %v804, %v810
      %vm815 = vcmask 64512
      %816 = vst.msk [vmem:[%s307] sm:$0xff] %vm815, %v811
      %817 = vst.msk [vmem:[%s307 + $0x8] sm:$0xff] %vm815, %v812
      %818 = vst.msk [vmem:[%s307 + $0x10] sm:$0xff] %vm815, %v813
      %819 = vst.msk [vmem:[%s307 + $0x18] sm:$0xff] %vm815, %v814
      %s820 = smul.u32 4, %s19
      %p821 = scmp.lt.s32.totalorder %s820, 7
      %s822 = scalar_select %p821, %s820, 7
      %s823 = smul.addr %s822, 8
      %s824 = scalar_lea.vmem %s8, %s823
      // Predicated region
      $region53: #{tpu_custom_call.1} parent=51 // pred_check
        %p825 = pneg %p210
      $region54: #{tpu_custom_call.1} parent=51 // pred_check_branch
        %827 = sbr.rel (%p825) target = $region56
      $region55: #{tpu_custom_call.1} parent=51 // pred_region
        %s828 = smul.u32 4, %s19
      $region56: #{tpu_custom_call.1} parent=51 // pred_fallthru
        _
    $region52: #{tpu_custom_call.1} parent=5 // pred_fallthru
      _
    %p829 = scmp.le.s32.totalorder 2, %s14
    // Predicated region
    $region57: #{tpu_custom_call.1} parent=5 // pred_check
      %p830 = pneg %p829
    $region58: #{tpu_custom_call.1} parent=5 // pred_check_branch
      %832 = sbr.rel (%p830) target = $region60
    $region59: #{tpu_custom_call.1} parent=5 // pred_region
      %s833 = ssub.s32 %s14, 2
      // Predicated region
      $region61: #{tpu_custom_call.1} parent=59 // pred_check
        %p834 = pneg %p216
      $region62: #{tpu_custom_call.1} parent=59 // pred_check_branch
        %836 = sbr.rel (%p834) target = $region64
      $region63: #{tpu_custom_call.1} parent=59 // pred_region
        %s837 = smul.u32 4, %s20
        %p838 = scmp.lt.s32.totalorder %s837, 7
        %s839 = scalar_select %p838, %s837, 7
        %s840 = smul.addr %s839, 8
        %s841 = scalar_lea.vmem %s8, %s840
      $region64: #{tpu_custom_call.1} parent=59 // pred_fallthru
        _
    $region60: #{tpu_custom_call.1} parent=5 // pred_fallthru
      _
  $region6: #{tpu_custom_call.1} parent=0 // loop_footer
    %s18 = sadd.s32 1, %s14
  $region7: #{tpu_custom_call.1} parent=0 // loop_footer_branch
    %13 = sbr.rel target = $region3
  $region8: #{tpu_custom_call.1} parent=0 // loop_exit
    _

</llo_original>
